<compile_context>
chip_gen: v5e
topology: v5e:2x2
jax: 0.10.0
libtpu: 0.0.40
codegen_flags: <defaults>
</compile_context>

<pallas_src>
import math
import numpy as np
import jax
import jax.numpy as jnp
from jax.experimental import pallas as pl
from jax.experimental.pallas import tpu as pltpu

_LANE = 128


# --------------------------------------------------------------------------- helpers
def _round_up(x, m):
    return ((x + m - 1) // m) * m


def _cdiv(a, b):
    return -(-a // b)


def _l2_normalize(v, eps=1e-12):
    # F.normalize(dim=-1): v / max(||v||_2, eps)
    return v / jnp.maximum(jnp.sqrt(jnp.sum(v * v, axis=-1, keepdims=True)), eps)


def _hw_budgets():
    """(weight-tile budget bytes, vmem_limit_bytes) per TPU generation.
    v5e/v6e: 128 MiB VMEM -> big double-buffered weight tiles; v7x: 64 MiB ->
    conservative.  Falls back to the v7x-safe numbers if the query fails."""
    try:
        info = pltpu.get_tpu_info()
        vmem = int(getattr(info, "vmem_capacity_bytes", 64 << 20))
    except Exception:
        vmem = 64 << 20
    if vmem >= (96 << 20):          # v5e / v6e
        return 20 << 20, 96 << 20
    return 12 << 20, 48 << 20        # v7x (or unknown)


def _column_tile(out_dim, in_features, budget_bytes):
    """Pick a 128-aligned column tile width sized from the total output dim so
    the double-buffered bf16 weight tile (2 * D * bn * 2 bytes) fills
    `budget_bytes`, then rebalance so padding stays < one lane-group per tile.
    Returns (bn, n_blocks, padded_out_dim)."""
    o_aligned = _round_up(out_dim, _LANE)
    cap = max(_LANE, (budget_bytes // (4 * in_features)) // _LANE * _LANE)
    bn = min(cap, o_aligned)
    n_blk = _cdiv(out_dim, bn)
    bn = _round_up(_cdiv(out_dim, n_blk), _LANE)   # rebalance, minimal padding
    return bn, n_blk, bn * n_blk


# --------------------------------------------------------------------------- kernels
def _cosine_kernel(xn_ref, wt_ref, o_ref):
    # bf16 operands into the MXU, f32 accumulation; weight rows pre-normalized.
    o_ref[...] = jnp.dot(xn_ref[...], wt_ref[...],
                         preferred_element_type=jnp.float32).astype(o_ref.dtype)


def _make_arcface_kernel(s, m, easy_margin):
    cos_m = math.cos(m)
    sin_m = math.sin(m)
    th = math.cos(math.pi - m)
    mm = math.sin(math.pi - m) * m

    def kernel(xn_ref, wt_ref, col_ref, lbl_ref, o_ref):
        # (B, bn) cosine tile: bf16 MXU matmul, f32 accumulate, f32 epilogue.
        cos = jnp.dot(xn_ref[...], wt_ref[...],
                      preferred_element_type=jnp.float32)
        sine = jnp.sqrt(jnp.clip(1.0 - cos * cos, 0.0, 1.0))
        phi = cos * cos_m - sine * sin_m
        if easy_margin:
            phi = jnp.where(cos > 0.0, phi, cos)
        else:
            phi = jnp.where(cos > th, phi, cos - mm)

        # Target mask built in-kernel: within-cluster column index (1, bn)
        # vs. label index (B, 1).  Padded columns carry -1 -> never a target.
        mask = col_ref[...] == lbl_ref[...]                  # (B, bn) bool
        o_ref[...] = (jnp.where(mask, phi, cos) * s).astype(o_ref.dtype)

    return kernel


# --------------------------------------------------------------------------- pallas_call builders
def _cosine_forward(xn_bf16, wt_bf16, bn, vmem_limit):
    B, D = xn_bf16.shape
    Opad = wt_bf16.shape[1]
    grid = (Opad // bn,)
    return pl.pallas_call(
        _cosine_kernel,
        out_shape=jax.ShapeDtypeStruct((B, Opad), jnp.float32),
        grid_spec=pltpu.PrefetchScalarGridSpec(
            num_scalar_prefetch=0,
            grid=grid,
            in_specs=[
                pl.BlockSpec((B, D), lambda j: (0, 0)),      # x: constant block
                pl.BlockSpec((D, bn), lambda j: (0, j)),     # weight column tile
            ],
            out_specs=pl.BlockSpec((B, bn), lambda j: (0, j)),
        ),
        compiler_params=pltpu.CompilerParams(
            dimension_semantics=("parallel",),
            vmem_limit_bytes=vmem_limit),
        cost_estimate=pl.CostEstimate(
            flops=2 * B * Opad * D,
            transcendentals=0,
            bytes_accessed=Opad * D * 2 + B * D * 2 + B * Opad * 4),
    )(xn_bf16, wt_bf16)


def _arcface_forward(kernel, xn_bf16, wt_bf16, col_ids, lbl_col, bn, vmem_limit):
    B, D = xn_bf16.shape
    Opad = wt_bf16.shape[1]
    grid = (Opad // bn,)
    return pl.pallas_call(
        kernel,
        out_shape=jax.ShapeDtypeStruct((B, Opad), jnp.float32),
        grid_spec=pltpu.PrefetchScalarGridSpec(
            num_scalar_prefetch=0,
            grid=grid,
            in_specs=[
                pl.BlockSpec((B, D), lambda j: (0, 0)),      # x: constant block
                pl.BlockSpec((D, bn), lambda j: (0, j)),     # weight column tile
                pl.BlockSpec((1, bn), lambda j: (0, j)),     # within-cluster col ids
                pl.BlockSpec((B, 1), lambda j: (0, 0)),      # label indices (constant)
            ],
            out_specs=pl.BlockSpec((B, bn), lambda j: (0, j)),
        ),
        compiler_params=pltpu.CompilerParams(
            dimension_semantics=("parallel",),
            vmem_limit_bytes=vmem_limit),
        cost_estimate=pl.CostEstimate(
            flops=2 * B * Opad * D,
            transcendentals=B * Opad,
            bytes_accessed=Opad * D * 2 + B * D * 2 + B * Opad * 4 + Opad * 4 + B * 4),
    )(xn_bf16, wt_bf16, col_ids, lbl_col)


# --------------------------------------------------------------------------- module wrapper
class MultiArcFacePallas:
    def __init__(self, in_features, out_features, n, s=20.0, m=0.5,
                 easy_margin=False, key=None):
        assert out_features % n == 0
        self.in_features = in_features
        self.out_features = out_features
        self.cluster_centres = n
        self.out_class_num = out_features // n
        self.s = float(s)
        self.m = float(m)
        self.easy_margin = easy_margin

        if key is None:
            key = jax.random.PRNGKey(0)
        bound = math.sqrt(6.0 / (in_features + out_features))   # xavier_uniform_
        self.weight = jax.random.uniform(
            key, (out_features, in_features), jnp.float32, -bound, bound)

        # Generation-aware tiling / VMEM budget.
        budget, self.vmem_limit = _hw_budgets()
        self.bn, _, self.o_pad = _column_tile(out_features, in_features, budget)

        # Pre-normalized, transposed, zero-padded bf16 weight (1/||w|| folded
        # into the streamed operand; half the HBM bytes vs f32).
        # TODO(synk): int8 (v5e/v6e) / fp8 (v7x) weight stream with a folded
        # per-row scale would halve the remaining dominant HBM traffic.
        wn = self.weight / jnp.maximum(
            jnp.sqrt(jnp.sum(self.weight * self.weight, axis=1, keepdims=True)), 1e-12)
        wt = jnp.zeros((in_features, self.o_pad), jnp.bfloat16)
        self.w_t_bf16 = wt.at[:, :out_features].set(wn.T.astype(jnp.bfloat16))

        # Per-column "index within its cluster" (padded columns -> -1 so they
        # never match a label).  Replaces the dense (B, C) one-hot operand.
        col = np.full((1, self.o_pad), -1, np.int32)
        col[0, :out_features] = (
            np.arange(out_features, dtype=np.int32) % self.out_class_num)
        self.col_in_cluster = jnp.asarray(col)

        self._arc_kernel = _make_arcface_kernel(self.s, self.m, self.easy_margin)

    def __call__(self, x, label=None):
        D, O = self.in_features, self.out_features

        if label is None:
            # PyTorch: input.squeeze().view(1, in_features) -> cosine only.
            x2 = jnp.reshape(jnp.squeeze(x), (1, D)).astype(jnp.float32)
            xn = _l2_normalize(x2).astype(jnp.bfloat16)
            out = _cosine_forward(xn, self.w_t_bf16, self.bn, self.vmem_limit)
            return out[:, :O]

        # PyTorch: input.squeeze(1).squeeze(2) -> (B, in_features)
        if x.ndim == 4:
            x2 = jnp.squeeze(jnp.squeeze(x, axis=1), axis=2)
        else:
            x2 = jnp.reshape(x, (x.shape[0], D))
        x2 = x2.astype(jnp.float32)
        B = x2.shape[0]
        xn = _l2_normalize(x2).astype(jnp.bfloat16)

        # TODO(synk): soft (non one-hot) labels would need the dense blend;
        # the kernel assumes hard targets (argmax of the one-hot).
        if label.ndim == 1:
            lbl_idx = label.astype(jnp.int32)
        else:
            lbl_idx = jnp.argmax(label, axis=-1).astype(jnp.int32)
        lbl_col = jnp.reshape(lbl_idx, (B, 1))

        out_flat = _arcface_forward(
            self._arc_kernel, xn, self.w_t_bf16, self.col_in_cluster,
            lbl_col, self.bn, self.vmem_limit)

        # (B, O_pad) -> drop padding -> (B, n, C) glue reshape.
        return jnp.reshape(out_flat[:, :O],
                           (B, self.cluster_centres, self.out_class_num))


# --------------------------------------------------------------------------- references
def _margin_blend(cosine_flat, label, module):
    B = cosine_flat.shape[0]
    cos = cosine_flat.reshape(B, module.cluster_centres, module.out_class_num)
    sine = jnp.sqrt(jnp.clip(1.0 - cos * cos, 0.0, 1.0))
    cos_m, sin_m = math.cos(module.m), math.sin(module.m)
    th = math.cos(math.pi - module.m)
    mm = math.sin(math.pi - module.m) * module.m
    phi = cos * cos_m - sine * sin_m
    if module.easy_margin:
        phi = jnp.where(cos > 0.0, phi, cos)
    else:
        phi = jnp.where(cos > th, phi, cos - mm)
    one_hot = jnp.broadcast_to(label[:, None, :], cos.shape)
    return (one_hot * phi + (1.0 - one_hot) * cos) * module.s


def _reference_f32(module, x, label):
    # Pure-f32 PyTorch semantics.
    x2 = jnp.squeeze(jnp.squeeze(x, axis=1), axis=2)
    xn = _l2_normalize(x2)
    wn = _l2_normalize(module.weight)
    cosine = jnp.dot(xn, wn.T, precision=jax.lax.Precision.HIGHEST)
    return _margin_blend(cosine, label, module)


def _reference_bf16(module, x, label):
    # Mirrors the kernel's bf16 operands (pre-normalized weight), f32 margin math.
    x2 = jnp.squeeze(jnp.squeeze(x, axis=1), axis=2)
    xn = _l2_normalize(x2).astype(jnp.bfloat16).astype(jnp.float32)
    wt = module.w_t_bf16[:, :module.out_features].astype(jnp.float32)
    cosine = jnp.dot(xn, wt, precision=jax.lax.Precision.HIGHEST)
    return _margin_blend(cosine, label, module)


# --------------------------------------------------------------------------- demo / self-check
if __name__ == "__main__":
    # Small shapes: in_features=256, out_features=512, n=4 -> out_class_num=128,
    # batch=8.  Single 512-wide column tile, in-kernel mask from label indices.
    B, D, O, N = 8, 256, 512, 4
    C = O // N

    key = jax.random.PRNGKey(0)
    k_w, k_x, k_l = jax.random.split(key, 3)

    module = MultiArcFacePallas(D, O, N, s=20.0, m=0.5, easy_margin=False, key=k_w)

    # PyTorch-style input (B, 1, D, 1) so squeeze(1).squeeze(2) applies.
    x = jax.random.normal(k_x, (B, 1, D, 1), jnp.float32)
    label_idx = jax.random.randint(k_l, (B,), 0, C)
    label = jax.nn.one_hot(label_idx, C, dtype=jnp.float32)

    out = jax.block_until_ready(module(x, label))
    assert out.shape == (B, N, C) and out.dtype == jnp.float32

    # Tight check vs a reference using the exact same bf16 matmul operands.
    ref_tight = _reference_bf16(module, x, label)
    assert jnp.allclose(out, ref_tight, atol=2e-3, rtol=1e-3)

    # Loose check vs pure-f32 PyTorch semantics (bf16 MXU operands only).
    ref_f32 = _reference_f32(module, x, label)
    assert jnp.allclose(out, ref_f32, atol=8e-2, rtol=2e-2)

    # Inference (label=None) path on a single example.
    out_nolabel = jax.block_until_ready(module(x[0], None))
    assert out_nolabel.shape == (1, O)
    x_single = jnp.reshape(jnp.squeeze(x[0]), (1, D))
    cos_ref = jnp.dot(_l2_normalize(x_single), _l2_normalize(module.weight).T,
                      precision=jax.lax.Precision.HIGHEST)
    assert jnp.allclose(out_nolabel, cos_ref, atol=1e-2, rtol=1e-2)

    # Non-128-aligned per-cluster class count (exercises padded tiled path,
    # which replaced the old untiled fallback).
    O2, N2 = 320, 4
    C2 = O2 // N2
    mod2 = MultiArcFacePallas(D, O2, N2, s=20.0, m=0.5, easy_margin=False, key=k_w)
    lbl2_idx = jax.random.randint(k_l, (B,), 0, C2)
    lbl2 = jax.nn.one_hot(lbl2_idx, C2, dtype=jnp.float32)
    out2 = jax.block_until_ready(mod2(x, lbl2))
    assert out2.shape == (B, N2, C2)
    ref2 = _reference_f32(mod2, x, lbl2)
    assert jnp.allclose(out2, ref2, atol=8e-2, rtol=2e-2)

    print("KERNEL_OK")
</pallas_src>

<mosaic_0001>
module attributes {stable_mosaic.version = 11 : i64} {
  func.func @kernel(%arg0: i32, %arg1: memref<8x256xbf16, #tpu.memory_space<vmem>>, %arg2: memref<256x512xbf16, #tpu.memory_space<vmem>>, %arg3: memref<1x512xi32, #tpu.memory_space<vmem>>, %arg4: memref<8x1xi32, #tpu.memory_space<vmem>>, %arg5: memref<8x512xf32, #tpu.memory_space<vmem>>) attributes {dimension_semantics = [#tpu.dimension_semantics<parallel>], iteration_bounds = array<i64: 1>, scalar_prefetch = 0 : i64, scratch_operands = 0 : i64, tpu.core_type = #tpu.core_type<tc>, window_params = [{pipeline_mode = #tpu.pipeline_mode<synchronous>, transform_indices = @transform_0, window_bounds = array<i64: 8, 256>}, {transform_indices = @transform_1, window_bounds = array<i64: 256, 512>}, {transform_indices = @transform_2, window_bounds = array<i64: 1, 512>}, {pipeline_mode = #tpu.pipeline_mode<synchronous>, transform_indices = @transform_3, window_bounds = array<i64: 8, 1>}, {transform_indices = @transform_4, window_bounds = array<i64: 8, 512>}]} {
    %c0 = arith.constant 0 : index
    %c0_0 = arith.constant 0 : index
    %0 = vector.load %arg1[%c0, %c0_0] : memref<8x256xbf16, #tpu.memory_space<vmem>>, vector<8x256xbf16>
    %c0_1 = arith.constant 0 : index
    %c0_2 = arith.constant 0 : index
    %1 = vector.load %arg2[%c0_1, %c0_2] : memref<256x512xbf16, #tpu.memory_space<vmem>>, vector<256x512xbf16>
    %cst = arith.constant dense<0.000000e+00> : vector<8x512xf32>
    %2 = tpu.matmul %0, %1, %cst {dimension_numbers = #tpu.dot_dimension_numbers<[1], [0], [0], [1], [0, 0, 1, 1], [], []>} : vector<8x256xbf16>, vector<256x512xbf16>, vector<8x512xf32> -> vector<8x512xf32>
    %3 = arith.mulf %2, %2 : vector<8x512xf32>
    %cst_3 = arith.constant 1.000000e+00 : f32
    %4 = vector.broadcast %cst_3 : f32 to vector<8x512xf32>
    %5 = arith.subf %4, %3 : vector<8x512xf32>
    %cst_4 = arith.constant 0.000000e+00 : f32
    %cst_5 = arith.constant 1.000000e+00 : f32
    %6 = vector.broadcast %cst_4 : f32 to vector<8x512xf32>
    %7 = arith.maximumf %6, %5 : vector<8x512xf32>
    %8 = vector.broadcast %cst_5 : f32 to vector<8x512xf32>
    %9 = arith.minimumf %8, %7 : vector<8x512xf32>
    %10 = math.sqrt %9 : vector<8x512xf32>
    %cst_6 = arith.constant 0.87758255 : f32
    %11 = vector.broadcast %cst_6 : f32 to vector<8x512xf32>
    %12 = arith.mulf %2, %11 : vector<8x512xf32>
    %cst_7 = arith.constant 0.47942555 : f32
    %13 = vector.broadcast %cst_7 : f32 to vector<8x512xf32>
    %14 = arith.mulf %10, %13 : vector<8x512xf32>
    %15 = arith.subf %12, %14 : vector<8x512xf32>
    %cst_8 = arith.constant -0.87758255 : f32
    %16 = vector.broadcast %cst_8 : f32 to vector<8x512xf32>
    %17 = arith.cmpf ogt, %2, %16 : vector<8x512xf32>
    %cst_9 = arith.constant 0.239712775 : f32
    %18 = vector.broadcast %cst_9 : f32 to vector<8x512xf32>
    %19 = arith.subf %2, %18 : vector<8x512xf32>
    %20 = arith.select %17, %15, %19 : vector<8x512xi1>, vector<8x512xf32>
    %c0_10 = arith.constant 0 : index
    %c0_11 = arith.constant 0 : index
    %21 = vector.load %arg3[%c0_10, %c0_11] : memref<1x512xi32, #tpu.memory_space<vmem>>, vector<1x512xi32>
    %c0_12 = arith.constant 0 : index
    %c0_13 = arith.constant 0 : index
    %22 = vector.load %arg4[%c0_12, %c0_13] : memref<8x1xi32, #tpu.memory_space<vmem>>, vector<8x1xi32>
    %23 = vector.broadcast %21 : vector<1x512xi32> to vector<8x512xi32>
    %24 = vector.broadcast %22 : vector<8x1xi32> to vector<8x512xi32>
    %25 = arith.cmpi eq, %23, %24 : vector<8x512xi32>
    %26 = arith.select %25, %20, %2 : vector<8x512xi1>, vector<8x512xf32>
    %cst_14 = arith.constant 2.000000e+01 : f32
    %27 = vector.broadcast %cst_14 : f32 to vector<8x512xf32>
    %28 = arith.mulf %26, %27 : vector<8x512xf32>
    %c0_15 = arith.constant 0 : index
    %c0_16 = arith.constant 0 : index
    %29 = vector.load %arg5[%c0_15, %c0_16] : memref<8x512xf32, #tpu.memory_space<vmem>>, vector<8x512xf32>
    tpu.vector_store %arg5[%c0_15, %c0_16], %28 {strides = array<i32>} : memref<8x512xf32, #tpu.memory_space<vmem>>, vector<8x512xf32>,
    return
  }
  func.func @transform_0(%arg0: i32) -> (i32, i32) {
    %c0_i32 = arith.constant 0 : i32
    %c0_i32_0 = arith.constant 0 : i32
    %c0_i32_1 = arith.constant 0 : i32
    return %c0_i32, %c0_i32_0 : i32, i32
  }
  func.func @transform_1(%arg0: i32) -> (i32, i32) {
    %c0_i32 = arith.constant 0 : i32
    %c0_i32_0 = arith.constant 0 : i32
    return %c0_i32, %arg0 : i32, i32
  }
  func.func @transform_2(%arg0: i32) -> (i32, i32) {
    %c0_i32 = arith.constant 0 : i32
    %c0_i32_0 = arith.constant 0 : i32
    return %c0_i32, %arg0 : i32, i32
  }
  func.func @transform_3(%arg0: i32) -> (i32, i32) {
    %c0_i32 = arith.constant 0 : i32
    %c0_i32_0 = arith.constant 0 : i32
    %c0_i32_1 = arith.constant 0 : i32
    return %c0_i32, %c0_i32_0 : i32, i32
  }
  func.func @transform_4(%arg0: i32) -> (i32, i32) {
    %c0_i32 = arith.constant 0 : i32
    %c0_i32_0 = arith.constant 0 : i32
    return %c0_i32, %arg0 : i32, i32
  }
}

</mosaic_0001>

<llo_original>
// kernel: tpu_custom_call.1
$region0: #{tpu_custom_call.1}
  #allocation0 [shape = 'u32[]', space=smem, size = 0x4, offset = 0x4, fixed_abs, tag = 'smem constant byte address 0x4 - core index']
  #allocation1 [shape = 'u32[72,128]{1,0:T(1,128)}', space=vmem, size = 0x9000, scoped, tag = 'internal scratch']
  %s0 = inlined_call_operand.vmem [shape: bf16[8,256], index: 0, kind: input, shape index: {}]
  %s1 = inlined_call_operand.hbm [shape: bf16[256,512], index: 1, kind: input, shape index: {}]
  %s2 = inlined_call_operand.hbm [shape: s32[1,512], index: 2, kind: input, shape index: {}]
  %s3 = inlined_call_operand.vmem [shape: s32[8,1], index: 3, kind: input, shape index: {}]
  %s4 = inlined_call_operand.hbm [shape: f32[8,512], index: 4, kind: output, shape index: {}]
  %s5 = sld [smem:[#allocation0]]
  $region34: #{tpu_custom_call.1} parent=0
    _
  %s7 = ssub.s32 1, %s5
  %s8 = scalar_select 0, %s7, %s5
  $region1: #{tpu_custom_call.1} parent=0
    #allocation2 [shape = 'u8[262144]{0}', space=vmem, size = 0x40000, scoped, tag = 'input window, operand 1, single buffered']
    #allocation3 [shape = 's32[1]{0}', space=sflag, size = 0x4, scoped, tag = 'scoped memory for tpu_custom_call.1']
    #allocation4 [shape = 's32[1]{0}', space=sflag, size = 0x4, scoped, tag = 'scoped memory for tpu_custom_call.1']
    #allocation5 [shape = 'u8[2048]{0}', space=vmem, size = 0x800, scoped, tag = 'input window, operand 2, single buffered']
    #allocation6 [shape = 's32[1]{0}', space=sflag, size = 0x4, scoped, tag = 'scoped memory for tpu_custom_call.1']
    #allocation7 [shape = 'u8[16384]{0}', space=vmem, size = 0x4000, scoped, tag = 'output window, operand 0, single buffered']
    %9 = vsyncpa [#allocation3], 0
    %10 = vsyncpa [#allocation6], 0
    %11 = vsyncpa [#allocation4], 0
    // Predicated region
    $region2: #{tpu_custom_call.1} parent=1 // pred_check
      _
    $region3: #{tpu_custom_call.1} parent=1 // pred_check_branch
      %13 = sbr.rel (0) target = $region5
    $region4: #{tpu_custom_call.1} parent=1 // pred_region
      _
    $region5: #{tpu_custom_call.1} parent=1 // pred_fallthru
      _
    // Predicated region
    $region6: #{tpu_custom_call.1} parent=1 // pred_check
      _
    $region7: #{tpu_custom_call.1} parent=1 // pred_check_branch
      %15 = sbr.rel (0) target = $region9
    $region8: #{tpu_custom_call.1} parent=1 // pred_region
      %17 = vsyncadd [#allocation3], 0
      %s18 = sshll.u32 %s1, 4
      %s19 = int_to_ptr.hbm [resolvable:$true] %s18
      %s20 = sshll.u32 [#allocation2], 4
      %s21 = int_to_ptr.vmem [resolvable:$true] %s20
      %26 = dma.hbm_to_vmem [thread:$0]  %s19, 8192, %s21, [#allocation3], 256, 256, 16
    $region9: #{tpu_custom_call.1} parent=1 // pred_fallthru
      _
    // Predicated region
    $region10: #{tpu_custom_call.1} parent=1 // pred_check
      _
    $region11: #{tpu_custom_call.1} parent=1 // pred_check_branch
      %28 = sbr.rel (0) target = $region13
    $region12: #{tpu_custom_call.1} parent=1 // pred_region
      %30 = vsyncadd [#allocation6], 0
      %s32 = sshll.u32 %s2, 4
      %s33 = int_to_ptr.hbm [resolvable:$true] %s32
      %s34 = sshll.u32 [#allocation5], 4
      %s35 = int_to_ptr.vmem [resolvable:$true] %s34
      %37 = dma.hbm_to_vmem [thread:$0]  %s33, 64, %s35, [#allocation6]
    $region13: #{tpu_custom_call.1} parent=1 // pred_fallthru
      _
    // Predicated region
    $region14: #{tpu_custom_call.1} parent=1 // pred_check
      _
    $region15: #{tpu_custom_call.1} parent=1 // pred_check_branch
      %39 = sbr.rel (0) target = $region17
    $region16: #{tpu_custom_call.1} parent=1 // pred_region
      _
    $region17: #{tpu_custom_call.1} parent=1 // pred_fallthru
      _
    // Predicated region
    $region18: #{tpu_custom_call.1} parent=1 // pred_check
      _
    $region19: #{tpu_custom_call.1} parent=1 // pred_check_branch
      %41 = sbr.rel (0) target = $region21
    $region20: #{tpu_custom_call.1} parent=1 // pred_region
      %43 = dma.done [#allocation3], 8192
    $region21: #{tpu_custom_call.1} parent=1 // pred_fallthru
      _
    // Predicated region
    $region22: #{tpu_custom_call.1} parent=1 // pred_check
      _
    $region23: #{tpu_custom_call.1} parent=1 // pred_check_branch
      %45 = sbr.rel (0) target = $region25
    $region24: #{tpu_custom_call.1} parent=1 // pred_region
      %47 = dma.done [#allocation6], 64
    $region25: #{tpu_custom_call.1} parent=1 // pred_fallthru
      _
    %v48 = vld [vmem:[%s0] sm:$0xff]
    %v49 = vld [vmem:[#allocation2] sm:$0xff]
    %v50 = vld [vmem:[#allocation2 + $0x8] sm:$0xff]
    %v51 = vld [vmem:[#allocation2 + $0x10] sm:$0xff]
    %v52 = vld [vmem:[#allocation2 + $0x18] sm:$0xff]
    %v53 = vld [vmem:[#allocation2 + $0x20] sm:$0xff]
    %v54 = vld [vmem:[#allocation2 + $0x28] sm:$0xff]
    %v55 = vld [vmem:[#allocation2 + $0x30] sm:$0xff]
    %v56 = vld [vmem:[#allocation2 + $0x38] sm:$0xff]
    %v57 = vld [vmem:[#allocation2 + $0x40] sm:$0xff]
    %v58 = vld [vmem:[#allocation2 + $0x48] sm:$0xff]
    %v59 = vld [vmem:[#allocation2 + $0x50] sm:$0xff]
    %v60 = vld [vmem:[#allocation2 + $0x58] sm:$0xff]
    %v61 = vld [vmem:[#allocation2 + $0x60] sm:$0xff]
    %v62 = vld [vmem:[#allocation2 + $0x68] sm:$0xff]
    %v63 = vld [vmem:[#allocation2 + $0x70] sm:$0xff]
    %v64 = vld [vmem:[#allocation2 + $0x78] sm:$0xff]
    %v65 = vld [vmem:[#allocation2 + $0x80] sm:$0xff]
    %v66 = vld [vmem:[#allocation2 + $0x88] sm:$0xff]
    %v67 = vld [vmem:[#allocation2 + $0x90] sm:$0xff]
    %v68 = vld [vmem:[#allocation2 + $0x98] sm:$0xff]
    %v69 = vld [vmem:[#allocation2 + $0xa0] sm:$0xff]
    %v70 = vld [vmem:[#allocation2 + $0xa8] sm:$0xff]
    %v71 = vld [vmem:[#allocation2 + $0xb0] sm:$0xff]
    %v72 = vld [vmem:[#allocation2 + $0xb8] sm:$0xff]
    %v73 = vld [vmem:[#allocation2 + $0xc0] sm:$0xff]
    %v74 = vld [vmem:[#allocation2 + $0xc8] sm:$0xff]
    %v75 = vld [vmem:[#allocation2 + $0xd0] sm:$0xff]
    %v76 = vld [vmem:[#allocation2 + $0xd8] sm:$0xff]
    %v77 = vld [vmem:[#allocation2 + $0xe0] sm:$0xff]
    %v78 = vld [vmem:[#allocation2 + $0xe8] sm:$0xff]
    %v79 = vld [vmem:[#allocation2 + $0xf0] sm:$0xff]
    %v80 = vld [vmem:[#allocation2 + $0xf8] sm:$0xff]
    %v81 = vld [vmem:[#allocation2 + $0x100] sm:$0xff]
    %v82 = vld [vmem:[#allocation2 + $0x108] sm:$0xff]
    %v83 = vld [vmem:[#allocation2 + $0x110] sm:$0xff]
    %v84 = vld [vmem:[#allocation2 + $0x118] sm:$0xff]
    %v85 = vld [vmem:[#allocation2 + $0x120] sm:$0xff]
    %v86 = vld [vmem:[#allocation2 + $0x128] sm:$0xff]
    %v87 = vld [vmem:[#allocation2 + $0x130] sm:$0xff]
    %v88 = vld [vmem:[#allocation2 + $0x138] sm:$0xff]
    %v89 = vld [vmem:[#allocation2 + $0x140] sm:$0xff]
    %v90 = vld [vmem:[#allocation2 + $0x148] sm:$0xff]
    %v91 = vld [vmem:[#allocation2 + $0x150] sm:$0xff]
    %v92 = vld [vmem:[#allocation2 + $0x158] sm:$0xff]
    %v93 = vld [vmem:[#allocation2 + $0x160] sm:$0xff]
    %v94 = vld [vmem:[#allocation2 + $0x168] sm:$0xff]
    %v95 = vld [vmem:[#allocation2 + $0x170] sm:$0xff]
    %v96 = vld [vmem:[#allocation2 + $0x178] sm:$0xff]
    %v97 = vld [vmem:[#allocation2 + $0x180] sm:$0xff]
    %v98 = vld [vmem:[#allocation2 + $0x188] sm:$0xff]
    %v99 = vld [vmem:[#allocation2 + $0x190] sm:$0xff]
    %v100 = vld [vmem:[#allocation2 + $0x198] sm:$0xff]
    %v101 = vld [vmem:[#allocation2 + $0x1a0] sm:$0xff]
    %v102 = vld [vmem:[#allocation2 + $0x1a8] sm:$0xff]
    %v103 = vld [vmem:[#allocation2 + $0x1b0] sm:$0xff]
    %v104 = vld [vmem:[#allocation2 + $0x1b8] sm:$0xff]
    %v105 = vld [vmem:[#allocation2 + $0x1c0] sm:$0xff]
    %v106 = vld [vmem:[#allocation2 + $0x1c8] sm:$0xff]
    %v107 = vld [vmem:[#allocation2 + $0x1d0] sm:$0xff]
    %v108 = vld [vmem:[#allocation2 + $0x1d8] sm:$0xff]
    %v109 = vld [vmem:[#allocation2 + $0x1e0] sm:$0xff]
    %v110 = vld [vmem:[#allocation2 + $0x1e8] sm:$0xff]
    %v111 = vld [vmem:[#allocation2 + $0x1f0] sm:$0xff]
    %v112 = vld [vmem:[#allocation2 + $0x1f8] sm:$0xff]
    %v114 = vunpack.c.l.b16 %v48
    %v115 = vunpack.c.h.b16 %v48
    %v116 = vpack.c.b16 %v114, %v114
    %v117 = vpack.c.b16 %v115, %v115
    %v184 = vunpack.c.l.b16 %v49
    %v185 = vunpack.c.h.b16 %v49
    %v186 = vunpack.c.l.b16 %v50
    %v187 = vunpack.c.h.b16 %v50
    %v188 = vunpack.c.l.b16 %v51
    %v189 = vunpack.c.h.b16 %v51
    %v190 = vunpack.c.l.b16 %v52
    %v191 = vunpack.c.h.b16 %v52
    %v192 = vunpack.c.l.b16 %v53
    %v193 = vunpack.c.h.b16 %v53
    %v194 = vunpack.c.l.b16 %v54
    %v195 = vunpack.c.h.b16 %v54
    %v196 = vunpack.c.l.b16 %v55
    %v197 = vunpack.c.h.b16 %v55
    %v198 = vunpack.c.l.b16 %v56
    %v199 = vunpack.c.h.b16 %v56
    %v200 = vunpack.c.l.b16 %v57
    %v201 = vunpack.c.h.b16 %v57
    %v202 = vunpack.c.l.b16 %v58
    %v203 = vunpack.c.h.b16 %v58
    %v204 = vunpack.c.l.b16 %v59
    %v205 = vunpack.c.h.b16 %v59
    %v206 = vunpack.c.l.b16 %v60
    %v207 = vunpack.c.h.b16 %v60
    %v208 = vunpack.c.l.b16 %v61
    %v209 = vunpack.c.h.b16 %v61
    %v210 = vunpack.c.l.b16 %v62
    %v211 = vunpack.c.h.b16 %v62
    %v212 = vunpack.c.l.b16 %v63
    %v213 = vunpack.c.h.b16 %v63
    %v214 = vunpack.c.l.b16 %v64
    %v215 = vunpack.c.h.b16 %v64
    %v216 = vunpack.c.l.b16 %v65
    %v217 = vunpack.c.h.b16 %v65
    %v218 = vunpack.c.l.b16 %v66
    %v219 = vunpack.c.h.b16 %v66
    %v220 = vunpack.c.l.b16 %v67
    %v221 = vunpack.c.h.b16 %v67
    %v222 = vunpack.c.l.b16 %v68
    %v223 = vunpack.c.h.b16 %v68
    %v224 = vunpack.c.l.b16 %v69
    %v225 = vunpack.c.h.b16 %v69
    %v226 = vunpack.c.l.b16 %v70
    %v227 = vunpack.c.h.b16 %v70
    %v228 = vunpack.c.l.b16 %v71
    %v229 = vunpack.c.h.b16 %v71
    %v230 = vunpack.c.l.b16 %v72
    %v231 = vunpack.c.h.b16 %v72
    %v232 = vunpack.c.l.b16 %v73
    %v233 = vunpack.c.h.b16 %v73
    %v234 = vunpack.c.l.b16 %v74
    %v235 = vunpack.c.h.b16 %v74
    %v236 = vunpack.c.l.b16 %v75
    %v237 = vunpack.c.h.b16 %v75
    %v238 = vunpack.c.l.b16 %v76
    %v239 = vunpack.c.h.b16 %v76
    %v240 = vunpack.c.l.b16 %v77
    %v241 = vunpack.c.h.b16 %v77
    %v242 = vunpack.c.l.b16 %v78
    %v243 = vunpack.c.h.b16 %v78
    %v244 = vunpack.c.l.b16 %v79
    %v245 = vunpack.c.h.b16 %v79
    %v246 = vunpack.c.l.b16 %v80
    %v247 = vunpack.c.h.b16 %v80
    %v248 = vunpack.c.l.b16 %v81
    %v249 = vunpack.c.h.b16 %v81
    %v250 = vunpack.c.l.b16 %v82
    %v251 = vunpack.c.h.b16 %v82
    %v252 = vunpack.c.l.b16 %v83
    %v253 = vunpack.c.h.b16 %v83
    %v254 = vunpack.c.l.b16 %v84
    %v255 = vunpack.c.h.b16 %v84
    %v256 = vunpack.c.l.b16 %v85
    %v257 = vunpack.c.h.b16 %v85
    %v258 = vunpack.c.l.b16 %v86
    %v259 = vunpack.c.h.b16 %v86
    %v260 = vunpack.c.l.b16 %v87
    %v261 = vunpack.c.h.b16 %v87
    %v262 = vunpack.c.l.b16 %v88
    %v263 = vunpack.c.h.b16 %v88
    %v264 = vunpack.c.l.b16 %v89
    %v265 = vunpack.c.h.b16 %v89
    %v266 = vunpack.c.l.b16 %v90
    %v267 = vunpack.c.h.b16 %v90
    %v268 = vunpack.c.l.b16 %v91
    %v269 = vunpack.c.h.b16 %v91
    %v270 = vunpack.c.l.b16 %v92
    %v271 = vunpack.c.h.b16 %v92
    %v272 = vunpack.c.l.b16 %v93
    %v273 = vunpack.c.h.b16 %v93
    %v274 = vunpack.c.l.b16 %v94
    %v275 = vunpack.c.h.b16 %v94
    %v276 = vunpack.c.l.b16 %v95
    %v277 = vunpack.c.h.b16 %v95
    %v278 = vunpack.c.l.b16 %v96
    %v279 = vunpack.c.h.b16 %v96
    %v280 = vunpack.c.l.b16 %v97
    %v281 = vunpack.c.h.b16 %v97
    %v282 = vunpack.c.l.b16 %v98
    %v283 = vunpack.c.h.b16 %v98
    %v284 = vunpack.c.l.b16 %v99
    %v285 = vunpack.c.h.b16 %v99
    %v286 = vunpack.c.l.b16 %v100
    %v287 = vunpack.c.h.b16 %v100
    %v288 = vunpack.c.l.b16 %v101
    %v289 = vunpack.c.h.b16 %v101
    %v290 = vunpack.c.l.b16 %v102
    %v291 = vunpack.c.h.b16 %v102
    %v292 = vunpack.c.l.b16 %v103
    %v293 = vunpack.c.h.b16 %v103
    %v294 = vunpack.c.l.b16 %v104
    %v295 = vunpack.c.h.b16 %v104
    %v296 = vunpack.c.l.b16 %v105
    %v297 = vunpack.c.h.b16 %v105
    %v298 = vunpack.c.l.b16 %v106
    %v299 = vunpack.c.h.b16 %v106
    %v300 = vunpack.c.l.b16 %v107
    %v301 = vunpack.c.h.b16 %v107
    %v302 = vunpack.c.l.b16 %v108
    %v303 = vunpack.c.h.b16 %v108
    %v304 = vunpack.c.l.b16 %v109
    %v305 = vunpack.c.h.b16 %v109
    %v306 = vunpack.c.l.b16 %v110
    %v307 = vunpack.c.h.b16 %v110
    %v308 = vunpack.c.l.b16 %v111
    %v309 = vunpack.c.h.b16 %v111
    %v310 = vunpack.c.l.b16 %v112
    %v311 = vunpack.c.h.b16 %v112
    %v312 = vpack.c.b16 %v188, %v184
    %v313 = vpack.c.b16 %v189, %v185
    %v314 = vpack.c.b16 %v190, %v186
    %v315 = vpack.c.b16 %v191, %v187
    %v316 = vpack.c.b16 %v196, %v192
    %v317 = vpack.c.b16 %v197, %v193
    %v318 = vpack.c.b16 %v198, %v194
    %v319 = vpack.c.b16 %v199, %v195
    %v320 = vpack.c.b16 %v204, %v200
    %v321 = vpack.c.b16 %v205, %v201
    %v322 = vpack.c.b16 %v206, %v202
    %v323 = vpack.c.b16 %v207, %v203
    %v324 = vpack.c.b16 %v212, %v208
    %v325 = vpack.c.b16 %v213, %v209
    %v326 = vpack.c.b16 %v214, %v210
    %v327 = vpack.c.b16 %v215, %v211
    %v328 = vpack.c.b16 %v220, %v216
    %v329 = vpack.c.b16 %v221, %v217
    %v330 = vpack.c.b16 %v222, %v218
    %v331 = vpack.c.b16 %v223, %v219
    %v332 = vpack.c.b16 %v228, %v224
    %v333 = vpack.c.b16 %v229, %v225
    %v334 = vpack.c.b16 %v230, %v226
    %v335 = vpack.c.b16 %v231, %v227
    %v336 = vpack.c.b16 %v236, %v232
    %v337 = vpack.c.b16 %v237, %v233
    %v338 = vpack.c.b16 %v238, %v234
    %v339 = vpack.c.b16 %v239, %v235
    %v340 = vpack.c.b16 %v244, %v240
    %v341 = vpack.c.b16 %v245, %v241
    %v342 = vpack.c.b16 %v246, %v242
    %v343 = vpack.c.b16 %v247, %v243
    %v344 = vpack.c.b16 %v252, %v248
    %v345 = vpack.c.b16 %v253, %v249
    %v346 = vpack.c.b16 %v254, %v250
    %v347 = vpack.c.b16 %v255, %v251
    %v348 = vpack.c.b16 %v260, %v256
    %v349 = vpack.c.b16 %v261, %v257
    %v350 = vpack.c.b16 %v262, %v258
    %v351 = vpack.c.b16 %v263, %v259
    %v352 = vpack.c.b16 %v268, %v264
    %v353 = vpack.c.b16 %v269, %v265
    %v354 = vpack.c.b16 %v270, %v266
    %v355 = vpack.c.b16 %v271, %v267
    %v356 = vpack.c.b16 %v276, %v272
    %v357 = vpack.c.b16 %v277, %v273
    %v358 = vpack.c.b16 %v278, %v274
    %v359 = vpack.c.b16 %v279, %v275
    %v360 = vpack.c.b16 %v284, %v280
    %v361 = vpack.c.b16 %v285, %v281
    %v362 = vpack.c.b16 %v286, %v282
    %v363 = vpack.c.b16 %v287, %v283
    %v364 = vpack.c.b16 %v292, %v288
    %v365 = vpack.c.b16 %v293, %v289
    %v366 = vpack.c.b16 %v294, %v290
    %v367 = vpack.c.b16 %v295, %v291
    %v368 = vpack.c.b16 %v300, %v296
    %v369 = vpack.c.b16 %v301, %v297
    %v370 = vpack.c.b16 %v302, %v298
    %v371 = vpack.c.b16 %v303, %v299
    %v372 = vpack.c.b16 %v308, %v304
    %v373 = vpack.c.b16 %v309, %v305
    %v374 = vpack.c.b16 %v310, %v306
    %v375 = vpack.c.b16 %v311, %v307
    %440 = vmatpush.bf16.msra.mxu0 %v340
    %441 = vmatpush.bf16.msra.mxu0 %v336
    %442 = vmatpush.bf16.msra.mxu0 %v332
    %443 = vmatpush.bf16.msra.mxu0 %v328
    %444 = vmatpush.bf16.msra.mxu0 %v324
    %445 = vmatpush.bf16.msra.mxu0 %v320
    %446 = vmatpush.bf16.msra.mxu0 %v316
    %447 = vmatpush.bf16.msra.mxu0 %v312
    %448 = vmatmul.bf16.gmra.mxu0 %v116
    %v449 = vpop.f32.mrf.mxu0
    %v450 = vadd.f32 0.0, %v449
    %v451 = vpop.f32.mrf.mxu0
    %452 = vdwg.mxu0
    %453 = vmatpush.bf16.msra.mxu0 %v372
    %454 = vmatpush.bf16.msra.mxu0 %v368
    %455 = vmatpush.bf16.msra.mxu0 %v364
    %456 = vmatpush.bf16.msra.mxu0 %v360
    %457 = vmatpush.bf16.msra.mxu0 %v356
    %458 = vmatpush.bf16.msra.mxu0 %v352
    %459 = vmatpush.bf16.msra.mxu0 %v348
    %460 = vmatpush.bf16.msra.mxu0 %v344
    %461 = vmatmul.bf16.gmra.mxu0 %v117
    %v462 = vpop.f32.mrf.mxu0
    %v463 = vadd.f32 %v450, %v462
    %v464 = vpop.f32.mrf.mxu0
    %465 = vdwg.mxu0
    %466 = vmatpush.bf16.msra.mxu0 %v341
    %467 = vmatpush.bf16.msra.mxu0 %v337
    %468 = vmatpush.bf16.msra.mxu0 %v333
    %469 = vmatpush.bf16.msra.mxu0 %v329
    %470 = vmatpush.bf16.msra.mxu0 %v325
    %471 = vmatpush.bf16.msra.mxu0 %v321
    %472 = vmatpush.bf16.msra.mxu0 %v317
    %473 = vmatpush.bf16.msra.mxu0 %v313
    %474 = vmatmul.bf16.gmra.mxu0 %v116
    %v475 = vpop.f32.mrf.mxu0
    %v476 = vadd.f32 0.0, %v475
    %v477 = vpop.f32.mrf.mxu0
    %478 = vdwg.mxu0
    %479 = vmatpush.bf16.msra.mxu0 %v373
    %480 = vmatpush.bf16.msra.mxu0 %v369
    %481 = vmatpush.bf16.msra.mxu0 %v365
    %482 = vmatpush.bf16.msra.mxu0 %v361
    %483 = vmatpush.bf16.msra.mxu0 %v357
    %484 = vmatpush.bf16.msra.mxu0 %v353
    %485 = vmatpush.bf16.msra.mxu0 %v349
    %486 = vmatpush.bf16.msra.mxu0 %v345
    %487 = vmatmul.bf16.gmra.mxu0 %v117
    %v488 = vpop.f32.mrf.mxu0
    %v489 = vadd.f32 %v476, %v488
    %v490 = vpop.f32.mrf.mxu0
    %491 = vdwg.mxu0
    %492 = vmatpush.bf16.msra.mxu0 %v342
    %493 = vmatpush.bf16.msra.mxu0 %v338
    %494 = vmatpush.bf16.msra.mxu0 %v334
    %495 = vmatpush.bf16.msra.mxu0 %v330
    %496 = vmatpush.bf16.msra.mxu0 %v326
    %497 = vmatpush.bf16.msra.mxu0 %v322
    %498 = vmatpush.bf16.msra.mxu0 %v318
    %499 = vmatpush.bf16.msra.mxu0 %v314
    %500 = vmatmul.bf16.gmra.mxu0 %v116
    %v501 = vpop.f32.mrf.mxu0
    %v502 = vadd.f32 0.0, %v501
    %v503 = vpop.f32.mrf.mxu0
    %504 = vdwg.mxu0
    %505 = vmatpush.bf16.msra.mxu0 %v374
    %506 = vmatpush.bf16.msra.mxu0 %v370
    %507 = vmatpush.bf16.msra.mxu0 %v366
    %508 = vmatpush.bf16.msra.mxu0 %v362
    %509 = vmatpush.bf16.msra.mxu0 %v358
    %510 = vmatpush.bf16.msra.mxu0 %v354
    %511 = vmatpush.bf16.msra.mxu0 %v350
    %512 = vmatpush.bf16.msra.mxu0 %v346
    %513 = vmatmul.bf16.gmra.mxu0 %v117
    %v514 = vpop.f32.mrf.mxu0
    %v515 = vadd.f32 %v502, %v514
    %v516 = vpop.f32.mrf.mxu0
    %517 = vdwg.mxu0
    %518 = vmatpush.bf16.msra.mxu0 %v343
    %519 = vmatpush.bf16.msra.mxu0 %v339
    %520 = vmatpush.bf16.msra.mxu0 %v335
    %521 = vmatpush.bf16.msra.mxu0 %v331
    %522 = vmatpush.bf16.msra.mxu0 %v327
    %523 = vmatpush.bf16.msra.mxu0 %v323
    %524 = vmatpush.bf16.msra.mxu0 %v319
    %525 = vmatpush.bf16.msra.mxu0 %v315
    %526 = vmatmul.bf16.gmra.mxu0 %v116
    %v527 = vpop.f32.mrf.mxu0
    %v528 = vadd.f32 0.0, %v527
    %v529 = vpop.f32.mrf.mxu0
    %530 = vdwg.mxu0
    %531 = vmatpush.bf16.msra.mxu0 %v375
    %532 = vmatpush.bf16.msra.mxu0 %v371
    %533 = vmatpush.bf16.msra.mxu0 %v367
    %534 = vmatpush.bf16.msra.mxu0 %v363
    %535 = vmatpush.bf16.msra.mxu0 %v359
    %536 = vmatpush.bf16.msra.mxu0 %v355
    %537 = vmatpush.bf16.msra.mxu0 %v351
    %538 = vmatpush.bf16.msra.mxu0 %v347
    %539 = vmatmul.bf16.gmra.mxu0 %v117
    %v540 = vpop.f32.mrf.mxu0
    %v541 = vadd.f32 %v528, %v540
    %v542 = vpop.f32.mrf.mxu0
    %543 = vdwg.mxu0
    %v544 = vmul.f32 %v463, %v463
    %v545 = vmul.f32 %v489, %v489
    %v546 = vmul.f32 %v515, %v515
    %v547 = vmul.f32 %v541, %v541
    %v548 = vsub.f32 1.0, %v544
    %v549 = vsub.f32 1.0, %v545
    %v550 = vsub.f32 1.0, %v546
    %v551 = vsub.f32 1.0, %v547
    %v552 = vmax.f32 %v548, 0.0
    %v553 = vmax.f32 %v549, 0.0
    %v554 = vmax.f32 %v550, 0.0
    %v555 = vmax.f32 %v551, 0.0
    %v556 = vmin.f32 %v552, 1.0
    %v557 = vmin.f32 %v553, 1.0
    %v558 = vmin.f32 %v554, 1.0
    %v559 = vmin.f32 %v555, 1.0
    %v560 = vrsqrt.pop %v556
    %v561 = vmul.f32 %v560, %v556
    %v562 = vmul.f32 %v561, %v560
    %v563 = vmul.f32 0.5, %v562
    %v564 = vsub.f32 1.5, %v563
    %v565 = vmul.f32 %v560, %v564
    %v566 = vmul.f32 %v556, %v565
    %vm567 = vcmp.eq.f32.partialorder %v556, inf
    %v568 = vsel %vm567, %v556, %v566
    %vm569 = vcmp.eq.f32.partialorder %v556, 0.0
    %v570 = vand.u32 %v556, 2147483648
    %v571 = vsel %vm569, %v570, %v568
    %v572 = vrsqrt.pop %v557
    %v573 = vmul.f32 %v572, %v557
    %v574 = vmul.f32 %v573, %v572
    %v575 = vmul.f32 0.5, %v574
    %v576 = vsub.f32 1.5, %v575
    %v577 = vmul.f32 %v572, %v576
    %v578 = vmul.f32 %v557, %v577
    %vm579 = vcmp.eq.f32.partialorder %v557, inf
    %v580 = vsel %vm579, %v557, %v578
    %vm581 = vcmp.eq.f32.partialorder %v557, 0.0
    %v582 = vand.u32 %v557, 2147483648
    %v583 = vsel %vm581, %v582, %v580
    %v584 = vrsqrt.pop %v558
    %v585 = vmul.f32 %v584, %v558
    %v586 = vmul.f32 %v585, %v584
    %v587 = vmul.f32 0.5, %v586
    %v588 = vsub.f32 1.5, %v587
    %v589 = vmul.f32 %v584, %v588
    %v590 = vmul.f32 %v558, %v589
    %vm591 = vcmp.eq.f32.partialorder %v558, inf
    %v592 = vsel %vm591, %v558, %v590
    %vm593 = vcmp.eq.f32.partialorder %v558, 0.0
    %v594 = vand.u32 %v558, 2147483648
    %v595 = vsel %vm593, %v594, %v592
    %v596 = vrsqrt.pop %v559
    %v597 = vmul.f32 %v596, %v559
    %v598 = vmul.f32 %v597, %v596
    %v599 = vmul.f32 0.5, %v598
    %v600 = vsub.f32 1.5, %v599
    %v601 = vmul.f32 %v596, %v600
    %v602 = vmul.f32 %v559, %v601
    %vm603 = vcmp.eq.f32.partialorder %v559, inf
    %v604 = vsel %vm603, %v559, %v602
    %vm605 = vcmp.eq.f32.partialorder %v559, 0.0
    %v606 = vand.u32 %v559, 2147483648
    %v607 = vsel %vm605, %v606, %v604
    %v608 = vmul.f32 %v463, 0.87758255
    %v609 = vmul.f32 %v489, 0.87758255
    %v610 = vmul.f32 %v515, 0.87758255
    %v611 = vmul.f32 %v541, 0.87758255
    %v612 = vmul.f32 %v571, 0.47942555
    %v613 = vmul.f32 %v583, 0.47942555
    %v614 = vmul.f32 %v595, 0.47942555
    %v615 = vmul.f32 %v607, 0.47942555
    %v616 = vsub.f32 %v608, %v612
    %v617 = vsub.f32 %v609, %v613
    %v618 = vsub.f32 %v610, %v614
    %v619 = vsub.f32 %v611, %v615
    %vm620 = vcmp.gt.f32.partialorder %v463, -0.87758255
    %vm621 = vcmp.gt.f32.partialorder %v489, -0.87758255
    %vm622 = vcmp.gt.f32.partialorder %v515, -0.87758255
    %vm623 = vcmp.gt.f32.partialorder %v541, -0.87758255
    %v624 = vsub.f32 %v463, 0.23971277
    %v625 = vsub.f32 %v489, 0.23971277
    %v626 = vsub.f32 %v515, 0.23971277
    %v627 = vsub.f32 %v541, 0.23971277
    %v628 = vsel %vm620, %v616, %v624
    %v629 = vsel %vm621, %v617, %v625
    %v630 = vsel %vm622, %v618, %v626
    %v631 = vsel %vm623, %v619, %v627
    %v632 = vld [vmem:[#allocation5] sm:$0xf]
    %v633 = vld [vmem:[%s3] sm:$0xff]
    %v634 = vperm.slane %v632, 0
    %v635 = vperm.slane %v632, 1
    %v636 = vperm.slane %v632, 2
    %v637 = vperm.slane %v632, 3
    %638 = vset.pattern.permute.xlu0 0
    %639 = vperm.xlu0 %638, %v633
    %v640 = vpop.permute.xlu0 %639
    %vm641 = vcmp.eq.s32.totalorder %v634, %v640
    %vm642 = vcmp.eq.s32.totalorder %v635, %v640
    %vm643 = vcmp.eq.s32.totalorder %v636, %v640
    %vm644 = vcmp.eq.s32.totalorder %v637, %v640
    %v645 = vsel %vm641, %v628, %v463
    %v646 = vsel %vm642, %v629, %v489
    %v647 = vsel %vm643, %v630, %v515
    %v648 = vsel %vm644, %v631, %v541
    %v649 = vmul.f32 %v645, 20.0
    %v650 = vmul.f32 %v646, 20.0
    %v651 = vmul.f32 %v647, 20.0
    %v652 = vmul.f32 %v648, 20.0
    %653 = vst [vmem:[#allocation7] sm:$0xff] %v649
    %654 = vst [vmem:[#allocation7 + $0x8] sm:$0xff] %v650
    %655 = vst [vmem:[#allocation7 + $0x10] sm:$0xff] %v651
    %656 = vst [vmem:[#allocation7 + $0x18] sm:$0xff] %v652
    // Predicated region
    $region26: #{tpu_custom_call.1} parent=1 // pred_check
      _
    $region27: #{tpu_custom_call.1} parent=1 // pred_check_branch
      %658 = sbr.rel (0) target = $region29
    $region28: #{tpu_custom_call.1} parent=1 // pred_region
      %660 = vsyncadd [#allocation4], 0
      %s662 = sshll.u32 [#allocation7], 4
      %s663 = int_to_ptr.vmem [resolvable:$true] %s662
      %s664 = sshll.u32 %s4, 4
      %s665 = int_to_ptr.hbm [resolvable:$true] %s664
      %667 = dma.vmem_to_hbm [thread:$0]  %s663, 512, %s665, [#allocation4]
    $region29: #{tpu_custom_call.1} parent=1 // pred_fallthru
      _
    // Predicated region
    $region30: #{tpu_custom_call.1} parent=1 // pred_check
      _
    $region31: #{tpu_custom_call.1} parent=1 // pred_check_branch
      %669 = sbr.rel (0) target = $region33
    $region32: #{tpu_custom_call.1} parent=1 // pred_region
      %671 = dma.done [#allocation4], 512
    $region33: #{tpu_custom_call.1} parent=1 // pred_fallthru
      _
    %672 = vsyncpa [#allocation3], 1
    %673 = vsyncpa [#allocation6], 1
    %674 = vsyncpa [#allocation4], 1

</llo_original>
